<compile_context>
chip_gen: v7x
topology: tpu7x:2x2x1
jax: 0.10.0
libtpu: 0.0.40
codegen_flags: <defaults>
</compile_context>

<pallas_src>
import jax
import jax.numpy as jnp
import numpy as np
from jax import lax
from jax.experimental import pallas as pl
from jax.experimental.pallas import tpu as pltpu


def critic_kernel(s_ref, a_ref, w1s_ref, w1a_ref, b1_ref,
                  w2_ref, b2_ref, w3_ref, b3_ref, o_ref):
    f32 = jnp.float32
    # Layer 1: split-weight bf16 matmuls (== concat([s, a], 1) @ W1), f32
    # accumulation, bias + ReLU in f32.
    h1 = (jnp.dot(s_ref[...], w1s_ref[...], preferred_element_type=f32)
          + jnp.dot(a_ref[...], w1a_ref[...], preferred_element_type=f32)
          + b1_ref[...])
    h1 = jnp.maximum(h1, 0.0)
    # Layer 2: bf16 matmul, f32 accumulate, bias + ReLU in f32.
    h2 = jnp.dot(h1.astype(w2_ref.dtype), w2_ref[...],
                 preferred_element_type=f32) + b2_ref[...]
    h2 = jnp.maximum(h2, 0.0)
    # Layer 3 (out_features == 1): NT matmul  w3[8, node2] x h2[T, node2]^T
    # -> (8, T) f32; row 0 is q as a lane-dense row (rows 1..7 of w3 are zero
    # padding).  Unmasked full-lane store instead of (T, 1) masked stores.
    q_rows = lax.dot_general(
        w3_ref[...], h2.astype(w3_ref.dtype),
        dimension_numbers=(((1,), (1,)), ((), ())),
        preferred_element_type=f32)                      # (8, TILE_B)
    q_row = q_rows[0:1, :] + b3_ref[...]                 # (1, TILE_B), f32
    o_ref[...] = q_row[None].astype(o_ref.dtype)         # (1, 1, TILE_B)


def _round_up(x, m):
    return ((x + m - 1) // m) * m


def _step_vmem_bytes(tile_b, state_dim, action_dim, node1, node2):
    """Rough per-call VMEM footprint for a given batch tile (bytes)."""
    bf16, f32 = 2, 4
    in_dim = state_dim + action_dim
    streamed = 2 * tile_b * in_dim * bf16              # states+actions, double-buffered
    out_buf = 2 * 8 * tile_b * f32                     # (1,1,T) block, sublane-padded, x2 buffers
    resident = (2 * (in_dim * node1 + node1 * node2 + 8 * node2) * bf16
                + 2 * (node1 + node2 + 1) * f32)       # weights/biases (default double-buffered)
    interm = tile_b * (node1 + node2) * (f32 + bf16)   # h1/h2 f32 + their bf16 casts
    return streamed + out_buf + resident + interm


def critic_forward(states, actions, params, *, tile_b=1024):
    """states: [B, state_dim], actions: [B, action_dim] -> q_values: [B, 1]."""
    w1, b1, w2, b2, w3, b3 = params
    B, state_dim = states.shape
    action_dim = actions.shape[1]
    node1 = w1.shape[1]
    node2 = w2.shape[1]
    in_dim = state_dim + action_dim

    # ---- bf16 storage for all MXU operands (halves HBM traffic & resident VMEM).
    s_bf = states.astype(jnp.bfloat16)
    a_bf = actions.astype(jnp.bfloat16)
    w1_s = w1[:state_dim, :].astype(jnp.bfloat16)      # split W1: no HBM concat
    w1_a = w1[state_dim:, :].astype(jnp.bfloat16)
    w2_bf = w2.astype(jnp.bfloat16)
    # Layer-3 weight as an 8-row LHS tile (row 0 = w3^T, rows 1..7 zero) for the
    # NT matmul producing a lane-dense q row.
    w3_pad = jnp.zeros((8, node2), jnp.bfloat16).at[0, :].set(
        w3[:, 0].astype(jnp.bfloat16))
    b1_f = b1.astype(jnp.float32)
    b2_f = b2.astype(jnp.float32)
    b3_f = b3.astype(jnp.float32)

    # ---- batch tile selection (16-aligned for bf16, VMEM-adaptive, >=2 steps).
    ALIGN = 16                        # bf16 packs 16 rows per vreg
    VMEM_BUDGET = 40 * 1024 * 1024    # per-step budget (v7x has 64 MiB physical)
    if B <= ALIGN:
        tile = B                      # full-extent block: always legal
    else:
        target = max(ALIGN, _round_up(min(tile_b, B), ALIGN))
        half = max(ALIGN, _round_up(-(-B // 2), ALIGN))   # >=2 grid steps for v7x 2-TC
        tile = min(target, half)
        while tile > ALIGN and _step_vmem_bytes(
                tile, state_dim, action_dim, node1, node2) > VMEM_BUDGET:
            tile = max(ALIGN, _round_up(tile // 2, ALIGN))
    num_tiles = pl.cdiv(B, tile)

    need = _step_vmem_bytes(tile, state_dim, action_dim, node1, node2)
    vmem_limit = int(min(max(need + (8 << 20), 16 << 20), 48 << 20))

    def resident(arr):
        # Constant index_map -> block DMA'd once and stays VMEM-resident.
        return pl.BlockSpec(arr.shape, lambda i: (0, 0))

    in_specs = [
        pl.BlockSpec((tile, state_dim), lambda i: (i, 0)),
        pl.BlockSpec((tile, action_dim), lambda i: (i, 0)),
        resident(w1_s), resident(w1_a), resident(b1_f),
        resident(w2_bf), resident(b2_f),
        resident(w3_pad), resident(b3_f),
    ]
    # Lane-dense output: one (1, 1, tile) row per grid step.
    out_specs = pl.BlockSpec((1, 1, tile), lambda i: (i, 0, 0))
    out_shape = jax.ShapeDtypeStruct((num_tiles, 1, tile), jnp.float32)

    flops = 2 * B * (in_dim * node1 + node1 * node2 + node2)
    bytes_accessed = (2 * B * in_dim + 4 * B
                      + 2 * (in_dim * node1 + node1 * node2 + 8 * node2)
                      + 4 * (node1 + node2 + 1))

    q_tiles = pl.pallas_call(
        critic_kernel,
        out_shape=out_shape,
        grid=(num_tiles,),
        in_specs=in_specs,
        out_specs=out_specs,
        compiler_params=pltpu.CompilerParams(
            dimension_semantics=("parallel",),
            vmem_limit_bytes=vmem_limit,
        ),
        cost_estimate=pl.CostEstimate(
            flops=flops, transcendentals=0, bytes_accessed=bytes_accessed),
    )(s_bf, a_bf, w1_s, w1_a, b1_f, w2_bf, b2_f, w3_pad, b3_f)

    # (num_tiles, 1, tile) -> (B, 1); padded rows of a partial last tile dropped.
    return q_tiles.reshape(-1)[:B].reshape(B, 1)


def init_params(state_dim, action_dim, node1, node2, key):
    """Mirrors `calibrated_init` (randn(out, in) / sqrt(fan_in)), zero biases.
    Weights stored transposed ([in, out]) so the kernel computes x @ W."""
    k1, k2, k3 = jax.random.split(key, 3)
    in_dim = state_dim + action_dim

    def calibrated(k, fan_in, fan_out):
        w = jax.random.normal(k, (fan_out, fan_in), dtype=jnp.float32) / np.sqrt(fan_in)
        return w.T  # [in, out]

    w1 = calibrated(k1, in_dim, node1)
    b1 = jnp.zeros((1, node1), dtype=jnp.float32)
    w2 = calibrated(k2, node1, node2)
    b2 = jnp.zeros((1, node2), dtype=jnp.float32)
    w3 = calibrated(k3, node2, 1)
    b3 = jnp.zeros((1, 1), dtype=jnp.float32)
    return (w1, b1, w2, b2, w3, b3)


def critic_reference(states, actions, params):
    """Pure-JAX f32 reference (matches the PyTorch forward)."""
    w1, b1, w2, b2, w3, b3 = params
    x = jnp.concatenate([states, actions], axis=1)
    h1 = jnp.maximum(x @ w1 + b1, 0.0)
    h2 = jnp.maximum(h1 @ w2 + b2, 0.0)
    return h2 @ w3 + b3


if __name__ == "__main__":
    # Small shapes consistent with the module's forward; batch=64 exercises a
    # 2-step grid (batch tiling + megacore sharding path).
    batch = 64
    state_dim = 16
    action_dim = 8
    node1 = 32
    node2 = 32

    key = jax.random.PRNGKey(0)
    k_s, k_a, k_p = jax.random.split(key, 3)
    states = jax.random.normal(k_s, (batch, state_dim), dtype=jnp.float32)
    actions = jax.random.normal(k_a, (batch, action_dim), dtype=jnp.float32)
    params = init_params(state_dim, action_dim, node1, node2, k_p)

    q = critic_forward(states, actions, params)
    jax.block_until_ready(q)

    q_ref = critic_reference(states, actions, params)
    assert q.shape == (batch, 1), q.shape
    # bf16 MXU operands with f32 accumulation -> bf16-class tolerance vs f32 ref.
    np.testing.assert_allclose(np.asarray(q), np.asarray(q_ref),
                               rtol=5e-2, atol=5e-2)

    print("KERNEL_OK")
</pallas_src>

<mosaic_0001>
module attributes {stable_mosaic.version = 11 : i64} {
  func.func @critic_kernel(%arg0: i32, %arg1: memref<32x16xbf16, #tpu.memory_space<vmem>>, %arg2: memref<32x8xbf16, #tpu.memory_space<vmem>>, %arg3: memref<16x32xbf16, #tpu.memory_space<vmem>>, %arg4: memref<8x32xbf16, #tpu.memory_space<vmem>>, %arg5: memref<1x32xf32, #tpu.memory_space<vmem>>, %arg6: memref<32x32xbf16, #tpu.memory_space<vmem>>, %arg7: memref<1x32xf32, #tpu.memory_space<vmem>>, %arg8: memref<8x32xbf16, #tpu.memory_space<vmem>>, %arg9: memref<1x1xf32, #tpu.memory_space<vmem>>, %arg10: memref<1x1x32xf32, #tpu.memory_space<vmem>>) attributes {dimension_semantics = [#tpu.dimension_semantics<parallel>], iteration_bounds = array<i64: 2>, scalar_prefetch = 0 : i64, scratch_operands = 0 : i64, tpu.core_type = #tpu.core_type<tc>, window_params = [{transform_indices = @transform_0, window_bounds = array<i64: 32, 16>}, {transform_indices = @transform_1, window_bounds = array<i64: 32, 8>}, {pipeline_mode = #tpu.pipeline_mode<synchronous>, transform_indices = @transform_2, window_bounds = array<i64: 16, 32>}, {pipeline_mode = #tpu.pipeline_mode<synchronous>, transform_indices = @transform_3, window_bounds = array<i64: 8, 32>}, {pipeline_mode = #tpu.pipeline_mode<synchronous>, transform_indices = @transform_4, window_bounds = array<i64: 1, 32>}, {pipeline_mode = #tpu.pipeline_mode<synchronous>, transform_indices = @transform_5, window_bounds = array<i64: 32, 32>}, {pipeline_mode = #tpu.pipeline_mode<synchronous>, transform_indices = @transform_6, window_bounds = array<i64: 1, 32>}, {pipeline_mode = #tpu.pipeline_mode<synchronous>, transform_indices = @transform_7, window_bounds = array<i64: 8, 32>}, {pipeline_mode = #tpu.pipeline_mode<synchronous>, transform_indices = @transform_8, window_bounds = array<i64: 1, 1>}, {transform_indices = @transform_9, window_bounds = array<i64: 1, 1, 32>}]} {
    %c0 = arith.constant 0 : index
    %c0_0 = arith.constant 0 : index
    %0 = vector.load %arg1[%c0, %c0_0] : memref<32x16xbf16, #tpu.memory_space<vmem>>, vector<32x16xbf16>
    %c0_1 = arith.constant 0 : index
    %c0_2 = arith.constant 0 : index
    %1 = vector.load %arg3[%c0_1, %c0_2] : memref<16x32xbf16, #tpu.memory_space<vmem>>, vector<16x32xbf16>
    %cst = arith.constant dense<0.000000e+00> : vector<32x32xf32>
    %2 = tpu.matmul %0, %1, %cst {dimension_numbers = #tpu.dot_dimension_numbers<[1], [0], [0], [1], [0, 0, 1, 1], [], []>} : vector<32x16xbf16>, vector<16x32xbf16>, vector<32x32xf32> -> vector<32x32xf32>
    %c0_3 = arith.constant 0 : index
    %c0_4 = arith.constant 0 : index
    %3 = vector.load %arg2[%c0_3, %c0_4] : memref<32x8xbf16, #tpu.memory_space<vmem>>, vector<32x8xbf16>
    %c0_5 = arith.constant 0 : index
    %c0_6 = arith.constant 0 : index
    %4 = vector.load %arg4[%c0_5, %c0_6] : memref<8x32xbf16, #tpu.memory_space<vmem>>, vector<8x32xbf16>
    %cst_7 = arith.constant dense<0.000000e+00> : vector<32x32xf32>
    %5 = tpu.matmul %3, %4, %cst_7 {dimension_numbers = #tpu.dot_dimension_numbers<[1], [0], [0], [1], [0, 0, 1, 1], [], []>} : vector<32x8xbf16>, vector<8x32xbf16>, vector<32x32xf32> -> vector<32x32xf32>
    %6 = arith.addf %2, %5 : vector<32x32xf32>
    %c0_8 = arith.constant 0 : index
    %c0_9 = arith.constant 0 : index
    %7 = vector.load %arg5[%c0_8, %c0_9] : memref<1x32xf32, #tpu.memory_space<vmem>>, vector<1x32xf32>
    %8 = vector.broadcast %7 : vector<1x32xf32> to vector<32x32xf32>
    %9 = arith.addf %6, %8 : vector<32x32xf32>
    %cst_10 = arith.constant 0.000000e+00 : f32
    %10 = vector.broadcast %cst_10 : f32 to vector<32x32xf32>
    %11 = arith.maximumf %9, %10 : vector<32x32xf32>
    %12 = arith.truncf %11 : vector<32x32xf32> to vector<32x32xbf16>
    %c0_11 = arith.constant 0 : index
    %c0_12 = arith.constant 0 : index
    %13 = vector.load %arg6[%c0_11, %c0_12] : memref<32x32xbf16, #tpu.memory_space<vmem>>, vector<32x32xbf16>
    %cst_13 = arith.constant dense<0.000000e+00> : vector<32x32xf32>
    %14 = tpu.matmul %12, %13, %cst_13 {dimension_numbers = #tpu.dot_dimension_numbers<[1], [0], [0], [1], [0, 0, 1, 1], [], []>} : vector<32x32xbf16>, vector<32x32xbf16>, vector<32x32xf32> -> vector<32x32xf32>
    %c0_14 = arith.constant 0 : index
    %c0_15 = arith.constant 0 : index
    %15 = vector.load %arg7[%c0_14, %c0_15] : memref<1x32xf32, #tpu.memory_space<vmem>>, vector<1x32xf32>
    %16 = vector.broadcast %15 : vector<1x32xf32> to vector<32x32xf32>
    %17 = arith.addf %14, %16 : vector<32x32xf32>
    %cst_16 = arith.constant 0.000000e+00 : f32
    %18 = vector.broadcast %cst_16 : f32 to vector<32x32xf32>
    %19 = arith.maximumf %17, %18 : vector<32x32xf32>
    %c0_17 = arith.constant 0 : index
    %c0_18 = arith.constant 0 : index
    %20 = vector.load %arg8[%c0_17, %c0_18] : memref<8x32xbf16, #tpu.memory_space<vmem>>, vector<8x32xbf16>
    %21 = arith.truncf %19 : vector<32x32xf32> to vector<32x32xbf16>
    %cst_19 = arith.constant dense<0.000000e+00> : vector<8x32xf32>
    %22 = tpu.matmul %20, %21, %cst_19 {dimension_numbers = #tpu.dot_dimension_numbers<[1], [1], [0], [0], [0, 0, 1, 0], [], []>} : vector<8x32xbf16>, vector<32x32xbf16>, vector<8x32xf32> -> vector<8x32xf32>
    %23 = vector.extract_strided_slice %22 {offsets = [0, 0], sizes = [1, 32], strides = [1, 1]} : vector<8x32xf32> to vector<1x32xf32>
    %c0_20 = arith.constant 0 : index
    %c0_21 = arith.constant 0 : index
    %24 = vector.load %arg9[%c0_20, %c0_21] : memref<1x1xf32, #tpu.memory_space<vmem>>, vector<1x1xf32>
    %25 = vector.broadcast %24 : vector<1x1xf32> to vector<1x32xf32>
    %26 = arith.addf %23, %25 : vector<1x32xf32>
    %27 = vector.shape_cast %26 : vector<1x32xf32> to vector<1x1x32xf32>
    %c0_22 = arith.constant 0 : index
    %c0_23 = arith.constant 0 : index
    %c0_24 = arith.constant 0 : index
    %28 = vector.load %arg10[%c0_22, %c0_23, %c0_24] : memref<1x1x32xf32, #tpu.memory_space<vmem>>, vector<1x1x32xf32>
    tpu.vector_store %arg10[%c0_22, %c0_23, %c0_24], %27 {strides = array<i32>} : memref<1x1x32xf32, #tpu.memory_space<vmem>>, vector<1x1x32xf32>,
    return
  }
  func.func @transform_0(%arg0: i32) -> (i32, i32) {
    %c0_i32 = arith.constant 0 : i32
    %c0_i32_0 = arith.constant 0 : i32
    return %arg0, %c0_i32 : i32, i32
  }
  func.func @transform_1(%arg0: i32) -> (i32, i32) {
    %c0_i32 = arith.constant 0 : i32
    %c0_i32_0 = arith.constant 0 : i32
    return %arg0, %c0_i32 : i32, i32
  }
  func.func @transform_2(%arg0: i32) -> (i32, i32) {
    %c0_i32 = arith.constant 0 : i32
    %c0_i32_0 = arith.constant 0 : i32
    %c0_i32_1 = arith.constant 0 : i32
    return %c0_i32, %c0_i32_0 : i32, i32
  }
  func.func @transform_3(%arg0: i32) -> (i32, i32) {
    %c0_i32 = arith.constant 0 : i32
    %c0_i32_0 = arith.constant 0 : i32
    %c0_i32_1 = arith.constant 0 : i32
    return %c0_i32, %c0_i32_0 : i32, i32
  }
  func.func @transform_4(%arg0: i32) -> (i32, i32) {
    %c0_i32 = arith.constant 0 : i32
    %c0_i32_0 = arith.constant 0 : i32
    %c0_i32_1 = arith.constant 0 : i32
    return %c0_i32, %c0_i32_0 : i32, i32
  }
  func.func @transform_5(%arg0: i32) -> (i32, i32) {
    %c0_i32 = arith.constant 0 : i32
    %c0_i32_0 = arith.constant 0 : i32
    %c0_i32_1 = arith.constant 0 : i32
    return %c0_i32, %c0_i32_0 : i32, i32
  }
  func.func @transform_6(%arg0: i32) -> (i32, i32) {
    %c0_i32 = arith.constant 0 : i32
    %c0_i32_0 = arith.constant 0 : i32
    %c0_i32_1 = arith.constant 0 : i32
    return %c0_i32, %c0_i32_0 : i32, i32
  }
  func.func @transform_7(%arg0: i32) -> (i32, i32) {
    %c0_i32 = arith.constant 0 : i32
    %c0_i32_0 = arith.constant 0 : i32
    %c0_i32_1 = arith.constant 0 : i32
    return %c0_i32, %c0_i32_0 : i32, i32
  }
  func.func @transform_8(%arg0: i32) -> (i32, i32) {
    %c0_i32 = arith.constant 0 : i32
    %c0_i32_0 = arith.constant 0 : i32
    %c0_i32_1 = arith.constant 0 : i32
    return %c0_i32, %c0_i32_0 : i32, i32
  }
  func.func @transform_9(%arg0: i32) -> (i32, i32, i32) {
    %c0_i32 = arith.constant 0 : i32
    %c0_i32_0 = arith.constant 0 : i32
    %c0_i32_1 = arith.constant 0 : i32
    return %arg0, %c0_i32, %c0_i32_0 : i32, i32, i32
  }
}

</mosaic_0001>

<llo_original>
// kernel: tpu_custom_call.1
$region0: #{tpu_custom_call.1}
  #allocation0 [shape = 'u32[]', space=smem, size = 0x4, offset = 0x4, fixed_abs, tag = 'smem constant byte address 0x4 - core index']
  #allocation1 [shape = 'u32[144,128]{1,0:T(1,128)}', space=vmem, size = 0x12000, scoped, tag = 'internal scratch']
  #allocation2 [shape = 'f32[1,1]{1,0:T(1,128)S(1)}', space=vmem, size = 0x200, scoped, tag = 'scoped memory for tpu_custom_call.1']
  %s0 = inlined_call_operand.vmem [shape: bf16[64,16], index: 0, kind: input, shape index: {}]
  %s1 = inlined_call_operand.vmem [shape: bf16[64,8], index: 1, kind: input, shape index: {}]
  %s2 = inlined_call_operand.vmem [shape: bf16[16,32], index: 2, kind: input, shape index: {}]
  %s3 = inlined_call_operand.vmem [shape: bf16[8,32], index: 3, kind: input, shape index: {}]
  %s4 = inlined_call_operand.vmem [shape: f32[1,32], index: 4, kind: input, shape index: {}]
  %s5 = inlined_call_operand.vmem [shape: bf16[32,32], index: 5, kind: input, shape index: {}]
  %s6 = inlined_call_operand.vmem [shape: f32[1,32], index: 6, kind: input, shape index: {}]
  %s7 = inlined_call_operand.vmem [shape: bf16[8,32], index: 7, kind: input, shape index: {}]
  %s8 = inlined_call_operand.<no memory space> [shape: f32[1,1], index: 8, kind: input, shape index: {}]
  %s9 = inlined_call_operand.hbm [shape: f32[2,1,32], index: 9, kind: output, shape index: {}]
  %s10 = sld [smem:[#allocation0]]
  $region69: #{tpu_custom_call.1} parent=0
    _
  %s12 = ssub.s32 1, %s10
  %s13 = scalar_select 0, %s12, %s10
  %v14 = vstv %s8
  %15 = vst [vmem:[#allocation2] sm:$0x1] %v14
  $region1: #{tpu_custom_call.1} parent=0
    #allocation3 [shape = 'u8[1024]{0}', space=vmem, size = 0x400, scoped, tag = 'output window, operand 0']
    #allocation4 [shape = 's32[2]{0}', space=sflag, size = 0x8, scoped, tag = 'scoped memory for tpu_custom_call.1']
    %16 = vsyncpa [#allocation4], 0
    %s17 = scalar_lea.sflag [#allocation4], 1
    %18 = vsyncpa %s17, 0
    loop: start=0, step=1, limit=4
    $region2: #{tpu_custom_call.1} parent=1 // loop_pre_header
      _
    $region3: #{tpu_custom_call.1} parent=1 // loop_header
      %s20 = sphi 0, %s24
      %p21 = scmp.ge.s32.totalorder %s20, 4
      %s30 = sphi 0, %s32
      %s33 = sphi 0, %s30
      %s34 = sphi 0, %s33
      %s50 = sphi 0, %s34
      %s56 = sphi 0, %s58
      %s59 = sphi 0, %s56
      %s60 = sphi 0, %s59
      %s76 = sphi 0, %s60
      %s80 = sphi 0, %s80
      %s82 = sphi 0, %s80
      %s83 = sphi 0, %s82
      %s97 = sphi 0, %s83
      %s101 = sphi 0, %s101
      %s103 = sphi 0, %s101
      %s104 = sphi 0, %s103
      %s118 = sphi 0, %s104
      %s122 = sphi 0, %s122
      %s124 = sphi 0, %s122
      %s125 = sphi 0, %s124
      %s139 = sphi 0, %s125
      %s143 = sphi 0, %s143
      %s145 = sphi 0, %s143
      %s146 = sphi 0, %s145
      %s160 = sphi 0, %s146
      %s164 = sphi 0, %s164
      %s166 = sphi 0, %s164
      %s167 = sphi 0, %s166
      %s181 = sphi 0, %s167
      %s185 = sphi 0, %s185
      %s187 = sphi 0, %s185
      %s188 = sphi 0, %s187
      %s202 = sphi 0, %s188
      %s206 = sphi 0, %s206
      %s208 = sphi 0, %s206
      %s209 = sphi 0, %s208
      %s223 = sphi 0, %s209
      %s229 = sphi 0, %s231
      %s232 = sphi 0, %s229
      %s233 = sphi 0, %s232
      %s249 = sphi 0, %s233
    $region4: #{tpu_custom_call.1} parent=1 // loop_header_branch
      %23 = sbr.rel (%p21) target = $region8
    $region5: #{tpu_custom_call.1} parent=1 // loop_body
      %s25 = ssub.s32 %s20, 1
      %s26 = ssub.s32 %s20, 2
      %s27 = sadd.s32 %s20, 1
      %s28 = ssub.s32 %s20, %s27
      %p29 = scmp.eq.s32.totalorder %s28, 0
      %s31 = sadd.s32 %s30, 1
      %s32 = scalar_select %p29, %s30, %s31
      %p35 = pneg %p29
      %p36 = scmp.eq.s32.totalorder %s20, 1
      %p37 = por %p35, %p36
      %p38 = scmp.ne.s32.totalorder %s30, %s33
      %p39 = scmp.eq.s32.totalorder %s20, 0
      %p40 = por %p38, %p39
      %p41 = scmp.ne.s32.totalorder %s30, %s33
      %p42 = scmp.eq.s32.totalorder %s25, 1
      %p43 = por %p41, %p42
      %p44 = scmp.ne.s32.totalorder %s33, %s34
      %p45 = scmp.eq.s32.totalorder %s25, 0
      %p46 = por %p44, %p45
      %p47 = scmp.ne.s32.totalorder %s33, %s34
      %p48 = scmp.eq.s32.totalorder %s26, 1
      %p49 = por %p47, %p48
      %p51 = scmp.ne.s32.totalorder %s34, %s50
      %p52 = scmp.eq.s32.totalorder %s26, 0
      %p53 = por %p51, %p52
      %s54 = ssub.s32 %s20, %s27
      %p55 = scmp.eq.s32.totalorder %s54, 0
      %s57 = sadd.s32 %s56, 1
      %s58 = scalar_select %p55, %s56, %s57
      %p61 = pneg %p55
      %p62 = scmp.eq.s32.totalorder %s20, 1
      %p63 = por %p61, %p62
      %p64 = scmp.ne.s32.totalorder %s56, %s59
      %p65 = scmp.eq.s32.totalorder %s20, 0
      %p66 = por %p64, %p65
      %p67 = scmp.ne.s32.totalorder %s56, %s59
      %p68 = scmp.eq.s32.totalorder %s25, 1
      %p69 = por %p67, %p68
      %p70 = scmp.ne.s32.totalorder %s59, %s60
      %p71 = scmp.eq.s32.totalorder %s25, 0
      %p72 = por %p70, %p71
      %p73 = scmp.ne.s32.totalorder %s59, %s60
      %p74 = scmp.eq.s32.totalorder %s26, 1
      %p75 = por %p73, %p74
      %p77 = scmp.ne.s32.totalorder %s60, %s76
      %p78 = scmp.eq.s32.totalorder %s26, 0
      %p79 = por %p77, %p78
      %s81 = sadd.s32 %s80, 1
      %p84 = scmp.eq.s32.totalorder %s20, 1
      %p85 = scmp.ne.s32.totalorder %s80, %s82
      %p86 = scmp.eq.s32.totalorder %s20, 0
      %p87 = por %p85, %p86
      %p88 = scmp.ne.s32.totalorder %s80, %s82
      %p89 = scmp.eq.s32.totalorder %s25, 1
      %p90 = por %p88, %p89
      %p91 = scmp.ne.s32.totalorder %s82, %s83
      %p92 = scmp.eq.s32.totalorder %s25, 0
      %p93 = por %p91, %p92
      %p94 = scmp.ne.s32.totalorder %s82, %s83
      %p95 = scmp.eq.s32.totalorder %s26, 1
      %p96 = por %p94, %p95
      %p98 = scmp.ne.s32.totalorder %s83, %s97
      %p99 = scmp.eq.s32.totalorder %s26, 0
      %p100 = por %p98, %p99
      %s102 = sadd.s32 %s101, 1
      %p105 = scmp.eq.s32.totalorder %s20, 1
      %p106 = scmp.ne.s32.totalorder %s101, %s103
      %p107 = scmp.eq.s32.totalorder %s20, 0
      %p108 = por %p106, %p107
      %p109 = scmp.ne.s32.totalorder %s101, %s103
      %p110 = scmp.eq.s32.totalorder %s25, 1
      %p111 = por %p109, %p110
      %p112 = scmp.ne.s32.totalorder %s103, %s104
      %p113 = scmp.eq.s32.totalorder %s25, 0
      %p114 = por %p112, %p113
      %p115 = scmp.ne.s32.totalorder %s103, %s104
      %p116 = scmp.eq.s32.totalorder %s26, 1
      %p117 = por %p115, %p116
      %p119 = scmp.ne.s32.totalorder %s104, %s118
      %p120 = scmp.eq.s32.totalorder %s26, 0
      %p121 = por %p119, %p120
      %s123 = sadd.s32 %s122, 1
      %p126 = scmp.eq.s32.totalorder %s20, 1
      %p127 = scmp.ne.s32.totalorder %s122, %s124
      %p128 = scmp.eq.s32.totalorder %s20, 0
      %p129 = por %p127, %p128
      %p130 = scmp.ne.s32.totalorder %s122, %s124
      %p131 = scmp.eq.s32.totalorder %s25, 1
      %p132 = por %p130, %p131
      %p133 = scmp.ne.s32.totalorder %s124, %s125
      %p134 = scmp.eq.s32.totalorder %s25, 0
      %p135 = por %p133, %p134
      %p136 = scmp.ne.s32.totalorder %s124, %s125
      %p137 = scmp.eq.s32.totalorder %s26, 1
      %p138 = por %p136, %p137
      %p140 = scmp.ne.s32.totalorder %s125, %s139
      %p141 = scmp.eq.s32.totalorder %s26, 0
      %p142 = por %p140, %p141
      %s144 = sadd.s32 %s143, 1
      %p147 = scmp.eq.s32.totalorder %s20, 1
      %p148 = scmp.ne.s32.totalorder %s143, %s145
      %p149 = scmp.eq.s32.totalorder %s20, 0
      %p150 = por %p148, %p149
      %p151 = scmp.ne.s32.totalorder %s143, %s145
      %p152 = scmp.eq.s32.totalorder %s25, 1
      %p153 = por %p151, %p152
      %p154 = scmp.ne.s32.totalorder %s145, %s146
      %p155 = scmp.eq.s32.totalorder %s25, 0
      %p156 = por %p154, %p155
      %p157 = scmp.ne.s32.totalorder %s145, %s146
      %p158 = scmp.eq.s32.totalorder %s26, 1
      %p159 = por %p157, %p158
      %p161 = scmp.ne.s32.totalorder %s146, %s160
      %p162 = scmp.eq.s32.totalorder %s26, 0
      %p163 = por %p161, %p162
      %s165 = sadd.s32 %s164, 1
      %p168 = scmp.eq.s32.totalorder %s20, 1
      %p169 = scmp.ne.s32.totalorder %s164, %s166
      %p170 = scmp.eq.s32.totalorder %s20, 0
      %p171 = por %p169, %p170
      %p172 = scmp.ne.s32.totalorder %s164, %s166
      %p173 = scmp.eq.s32.totalorder %s25, 1
      %p174 = por %p172, %p173
      %p175 = scmp.ne.s32.totalorder %s166, %s167
      %p176 = scmp.eq.s32.totalorder %s25, 0
      %p177 = por %p175, %p176
      %p178 = scmp.ne.s32.totalorder %s166, %s167
      %p179 = scmp.eq.s32.totalorder %s26, 1
      %p180 = por %p178, %p179
      %p182 = scmp.ne.s32.totalorder %s167, %s181
      %p183 = scmp.eq.s32.totalorder %s26, 0
      %p184 = por %p182, %p183
      %s186 = sadd.s32 %s185, 1
      %p189 = scmp.eq.s32.totalorder %s20, 1
      %p190 = scmp.ne.s32.totalorder %s185, %s187
      %p191 = scmp.eq.s32.totalorder %s20, 0
      %p192 = por %p190, %p191
      %p193 = scmp.ne.s32.totalorder %s185, %s187
      %p194 = scmp.eq.s32.totalorder %s25, 1
      %p195 = por %p193, %p194
      %p196 = scmp.ne.s32.totalorder %s187, %s188
      %p197 = scmp.eq.s32.totalorder %s25, 0
      %p198 = por %p196, %p197
      %p199 = scmp.ne.s32.totalorder %s187, %s188
      %p200 = scmp.eq.s32.totalorder %s26, 1
      %p201 = por %p199, %p200
      %p203 = scmp.ne.s32.totalorder %s188, %s202
      %p204 = scmp.eq.s32.totalorder %s26, 0
      %p205 = por %p203, %p204
      %s207 = sadd.s32 %s206, 1
      %p210 = scmp.eq.s32.totalorder %s20, 1
      %p211 = scmp.ne.s32.totalorder %s206, %s208
      %p212 = scmp.eq.s32.totalorder %s20, 0
      %p213 = por %p211, %p212
      %p214 = scmp.ne.s32.totalorder %s206, %s208
      %p215 = scmp.eq.s32.totalorder %s25, 1
      %p216 = por %p214, %p215
      %p217 = scmp.ne.s32.totalorder %s208, %s209
      %p218 = scmp.eq.s32.totalorder %s25, 0
      %p219 = por %p217, %p218
      %p220 = scmp.ne.s32.totalorder %s208, %s209
      %p221 = scmp.eq.s32.totalorder %s26, 1
      %p222 = por %p220, %p221
      %p224 = scmp.ne.s32.totalorder %s209, %s223
      %p225 = scmp.eq.s32.totalorder %s26, 0
      %p226 = por %p224, %p225
      %s227 = ssub.s32 %s20, %s27
      %p228 = scmp.eq.s32.totalorder %s227, 0
      %s230 = sadd.s32 %s229, 1
      %s231 = scalar_select %p228, %s229, %s230
      %p234 = pneg %p228
      %p235 = scmp.eq.s32.totalorder %s20, 1
      %p236 = por %p234, %p235
      %p237 = scmp.ne.s32.totalorder %s229, %s232
      %p238 = scmp.eq.s32.totalorder %s20, 0
      %p239 = por %p237, %p238
      %p240 = scmp.ne.s32.totalorder %s229, %s232
      %p241 = scmp.eq.s32.totalorder %s25, 1
      %p242 = por %p240, %p241
      %p243 = scmp.ne.s32.totalorder %s232, %s233
      %p244 = scmp.eq.s32.totalorder %s25, 0
      %p245 = por %p243, %p244
      %p246 = scmp.ne.s32.totalorder %s232, %s233
      %p247 = scmp.eq.s32.totalorder %s26, 1
      %p248 = por %p246, %p247
      %p250 = scmp.ne.s32.totalorder %s233, %s249
      %p251 = scmp.eq.s32.totalorder %s26, 0
      %p252 = por %p250, %p251
      %p253 = scmp.le.s32.totalorder 1, %s20
      %p254 = scmp.lt.s32.totalorder %s20, 3
      %p255 = pnand %p253, %p254
      %p256 = pneg %p255
      // Predicated region
      $region9: #{tpu_custom_call.1} parent=5 // pred_check
        _
      $region10: #{tpu_custom_call.1} parent=5 // pred_check_branch
        %258 = sbr.rel (%p255) target = $region12
      $region11: #{tpu_custom_call.1} parent=5 // pred_region
        %s259 = ssub.s32 %s20, 1
        // Predicated region
        $region13: #{tpu_custom_call.1} parent=11 // pred_check
          %p260 = pneg %p93
        $region14: #{tpu_custom_call.1} parent=11 // pred_check_branch
          %262 = sbr.rel (%p260) target = $region16
        $region15: #{tpu_custom_call.1} parent=11 // pred_region
          _
        $region16: #{tpu_custom_call.1} parent=11 // pred_fallthru
          _
        // Predicated region
        $region17: #{tpu_custom_call.1} parent=11 // pred_check
          %p263 = pneg %p114
        $region18: #{tpu_custom_call.1} parent=11 // pred_check_branch
          %265 = sbr.rel (%p263) target = $region20
        $region19: #{tpu_custom_call.1} parent=11 // pred_region
          _
        $region20: #{tpu_custom_call.1} parent=11 // pred_fallthru
          _
        // Predicated region
        $region21: #{tpu_custom_call.1} parent=11 // pred_check
          %p266 = pneg %p135
        $region22: #{tpu_custom_call.1} parent=11 // pred_check_branch
          %268 = sbr.rel (%p266) target = $region24
        $region23: #{tpu_custom_call.1} parent=11 // pred_region
          _
        $region24: #{tpu_custom_call.1} parent=11 // pred_fallthru
          _
        // Predicated region
        $region25: #{tpu_custom_call.1} parent=11 // pred_check
          %p269 = pneg %p156
        $region26: #{tpu_custom_call.1} parent=11 // pred_check_branch
          %271 = sbr.rel (%p269) target = $region28
        $region27: #{tpu_custom_call.1} parent=11 // pred_region
          _
        $region28: #{tpu_custom_call.1} parent=11 // pred_fallthru
          _
        // Predicated region
        $region29: #{tpu_custom_call.1} parent=11 // pred_check
          %p272 = pneg %p177
        $region30: #{tpu_custom_call.1} parent=11 // pred_check_branch
          %274 = sbr.rel (%p272) target = $region32
        $region31: #{tpu_custom_call.1} parent=11 // pred_region
          _
        $region32: #{tpu_custom_call.1} parent=11 // pred_fallthru
          _
        // Predicated region
        $region33: #{tpu_custom_call.1} parent=11 // pred_check
          %p275 = pneg %p198
        $region34: #{tpu_custom_call.1} parent=11 // pred_check_branch
          %277 = sbr.rel (%p275) target = $region36
        $region35: #{tpu_custom_call.1} parent=11 // pred_region
          _
        $region36: #{tpu_custom_call.1} parent=11 // pred_fallthru
          _
        // Predicated region
        $region37: #{tpu_custom_call.1} parent=11 // pred_check
          %p278 = pneg %p219
        $region38: #{tpu_custom_call.1} parent=11 // pred_check_branch
          %280 = sbr.rel (%p278) target = $region40
        $region39: #{tpu_custom_call.1} parent=11 // pred_region
          _
        $region40: #{tpu_custom_call.1} parent=11 // pred_fallthru
          _
      $region12: #{tpu_custom_call.1} parent=5 // pred_fallthru
        _
      %p281 = scmp.lt.s32.totalorder %s20, 2
      // Predicated region
      $region41: #{tpu_custom_call.1} parent=5 // pred_check
        %p282 = pneg %p281
      $region42: #{tpu_custom_call.1} parent=5 // pred_check_branch
        %284 = sbr.rel (%p282) target = $region44
      $region43: #{tpu_custom_call.1} parent=5 // pred_region
        // Predicated region
        $region45: #{tpu_custom_call.1} parent=43 // pred_check
          %p285 = pneg %p40
        $region46: #{tpu_custom_call.1} parent=43 // pred_check_branch
          %287 = sbr.rel (%p285) target = $region48
        $region47: #{tpu_custom_call.1} parent=43 // pred_region
          %s288 = smul.u32 4, %s20
          %p289 = scmp.lt.s32.totalorder %s288, 7
          %s290 = scalar_select %p289, %s288, 7
          %s291 = smul.addr %s290, 4
          %s292 = scalar_lea.vmem %s0, %s291
          %s293 = smul.u32 4, %s20
        $region48: #{tpu_custom_call.1} parent=43 // pred_fallthru
          _
        // Predicated region
        $region49: #{tpu_custom_call.1} parent=43 // pred_check
          %p294 = pneg %p66
        $region50: #{tpu_custom_call.1} parent=43 // pred_check_branch
          %296 = sbr.rel (%p294) target = $region52
        $region51: #{tpu_custom_call.1} parent=43 // pred_region
          %s297 = smul.u32 4, %s20
          %p298 = scmp.lt.s32.totalorder %s297, 7
          %s299 = scalar_select %p298, %s297, 7
          %s300 = smul.addr %s299, 4
          %s301 = scalar_lea.vmem %s1, %s300
          %s302 = smul.u32 4, %s20
        $region52: #{tpu_custom_call.1} parent=43 // pred_fallthru
          _
      $region44: #{tpu_custom_call.1} parent=5 // pred_fallthru
        _
      %p303 = scmp.le.s32.totalorder 1, %s20
      %p304 = scmp.lt.s32.totalorder %s20, 3
      %p305 = pnand %p303, %p304
      %p306 = pneg %p305
      // Predicated region
      $region53: #{tpu_custom_call.1} parent=5 // pred_check
        _
      $region54: #{tpu_custom_call.1} parent=5 // pred_check_branch
        %308 = sbr.rel (%p305) target = $region56
      $region55: #{tpu_custom_call.1} parent=5 // pred_region
        %s309 = ssub.s32 %s20, 1
        %s310 = smul.u32 4, %s25
        %p311 = scmp.lt.s32.totalorder %s310, 7
        %s312 = scalar_select %p311, %s310, 7
        %s313 = smul.addr %s312, 4
        %s314 = scalar_lea.vmem %s0, %s313
        %p315 = pneg %p46
        %p316 = pneg %p43
        %s317 = smul.u32 4, %s25
        %p318 = scmp.lt.s32.totalorder %s317, 7
        %s319 = scalar_select %p318, %s317, 7
        %s320 = smul.addr %s319, 4
        %s321 = scalar_lea.vmem %s1, %s320
        %p322 = pneg %p72
        %p323 = pneg %p69
        %p324 = pneg %p93
        %p325 = pneg %p90
        %p326 = pneg %p114
        %p327 = pneg %p111
        %p328 = pneg %p135
        %p329 = pneg %p132
        %p330 = pneg %p156
        %p331 = pneg %p153
        %p332 = pneg %p177
        %p333 = pneg %p174
        %p334 = pneg %p198
        %p335 = pneg %p195
        %p336 = pneg %p219
        %p337 = pneg %p216
        %p338 = pneg %p245
        %p339 = pneg %p242
        %s340 = sand.u32 %s232, 1
        %s341 = scalar_lea.sflag [#allocation4], %s340
        %s342 = sand.u32 %s232, 1
        %s343 = scalar_lea.vmem [#allocation3], %s342
        %s344 = smul.u32 4, %s25
        %p345 = scmp.lt.s32.totalorder %s344, 7
        %s346 = scalar_select %p345, %s344, 7
        %s347 = smul.addr %s346, 4
        %s348 = scalar_lea.vmem %s0, %s347
        %s349 = smul.u32 4, %s25
        %s350 = smul.u32 4, %s25
        %p351 = scmp.lt.s32.totalorder %s350, 7
        %s352 = scalar_select %p351, %s350, 7
        %s353 = smul.addr %s352, 4
        %s354 = scalar_lea.vmem %s1, %s353
        %s355 = smul.u32 4, %s25
        %v357 = vld [vmem:[%s348] sm:$0xf]
        %v358 = vld [vmem:[%s348 + $0x4] sm:$0xf]
        %v359 = vld [vmem:[%s348 + $0x8] sm:$0xf]
        %v360 = vld [vmem:[%s348 + $0xc] sm:$0xf]
        %v361 = vld [vmem:[%s2] sm:$0xf]
        %v362 = vld [vmem:[%s2 + $0x4] sm:$0xf]
        %v363 = vld [vmem:[%s354] sm:$0xf]
        %v364 = vld [vmem:[%s354 + $0x4] sm:$0xf]
        %v365 = vld [vmem:[%s354 + $0x8] sm:$0xf]
        %v366 = vld [vmem:[%s354 + $0xc] sm:$0xf]
        %v367 = vld [vmem:[%s3] sm:$0xf]
        %v372 = vunpack.c.l.b16 %v363
        %v373 = vunpack.c.l.b16 %v364
        %v374 = vunpack.c.l.b16 %v365
        %v375 = vunpack.c.l.b16 %v366
        %v376 = vpack.c.b16 %v373, %v372
        %v377 = vpack.c.b16 %v375, %v374
        %vm378 = vcmask 64512
        %v380 = vsel %vm378, %v376, 0
        %v383 = vsel %vm378, %v377, 0
        %vm385 = vcmask 1043456
        %v387 = vsel %vm385, %v367, 0
        %389 = vmatprep.subr.bf16.mxu0 0
        %390 = vmatpush1.bf16.msra.mxu0 %v387
        %391 = vmatprep.subr.bf16.mxu0 0
        %392 = vmatpush1.bf16.msra.mxu0 0
        %393 = vmatprep.subr.bf16.mxu0 0
        %394 = vmatpush1.bf16.msra.mxu0 0
        %395 = vmatprep.subr.bf16.mxu0 0
        %396 = vmatpush1.bf16.msra.mxu0 0
        %397 = vmatprep.subr.bf16.mxu0 0
        %398 = vmatpush1.bf16.msra.mxu0 0
        %399 = vmatprep.subr.bf16.mxu0 0
        %400 = vmatpush1.bf16.msra.mxu0 0
        %401 = vmatprep.subr.bf16.mxu0 0
        %402 = vmatpush1.bf16.msra.mxu0 0
        %403 = vmatprep.subr.bf16.mxu0 0
        %404 = vmatpush1.bf16.msra.mxu0 0
        %405 = vmatprep.subr.bf16.mxu0 0
        %406 = vmatpush1.bf16.msra.mxu0 0
        %407 = vmatprep.subr.bf16.mxu0 0
        %408 = vmatpush1.bf16.msra.mxu0 0
        %409 = vmatprep.subr.bf16.mxu0 0
        %410 = vmatpush1.bf16.msra.mxu0 0
        %411 = vmatprep.subr.bf16.mxu0 0
        %412 = vmatpush1.bf16.msra.mxu0 0
        %413 = vmatprep.subr.bf16.mxu0 0
        %414 = vmatpush1.bf16.msra.mxu0 0
        %415 = vmatprep.subr.bf16.mxu0 0
        %416 = vmatpush1.bf16.msra.mxu0 0
        %417 = vmatprep.subr.bf16.mxu0 0
        %418 = vmatpush1.bf16.msra.mxu0 0
        %419 = vmatprep.subr.bf16.mxu0 0
        %420 = vmatpush1.bf16.msra.mxu0 0
        %421 = vmatprep.mubr.bf16.mxu0 0
        %422 = vmatmul.mubr.bf16.gmra.mrb[0].mxu0 %v380
        %v423 = vpop.f32.mrb[0].mxu0
        %v424 = vadd.f32 0.0, %v423
        %v425 = vpop.f32.mrb[0].mxu0
        %v426 = vpop.f32.mrb[0].mxu0
        %v427 = vadd.f32 0.0, %v426
        %v428 = vpop.f32.mrb[0].mxu0
        %429 = vmatprep.mubr.bf16.mxu0 0
        %430 = vmatmul.mubr.bf16.gmra.mrb[0].mxu0 %v383
        %v431 = vpop.f32.mrb[0].mxu0
        %v432 = vadd.f32 0.0, %v431
        %v433 = vpop.f32.mrb[0].mxu0
        %v434 = vpop.f32.mrb[0].mxu0
        %v435 = vadd.f32 0.0, %v434
        %v436 = vpop.f32.mrb[0].mxu0
        %437 = vdwg.mxu0
        %v442 = vunpack.c.l.b16 %v357
        %v443 = vunpack.c.l.b16 %v358
        %v444 = vunpack.c.l.b16 %v359
        %v445 = vunpack.c.l.b16 %v360
        %v446 = vpack.c.b16 %v443, %v442
        %v447 = vpack.c.b16 %v445, %v444
        %v450 = vunpack.c.l.b16 %v361
        %v451 = vunpack.c.l.b16 %v362
        %v452 = vpack.c.b16 %v451, %v450
        %vm454 = vcmask 130048
        %v456 = vsel %vm454, %v446, 0
        %v459 = vsel %vm454, %v447, 0
        %461 = vmatprep.subr.bf16.mxu0 0
        %462 = vmatpush1.bf16.msra.mxu0 %v452
        %463 = vmatprep.subr.bf16.mxu0 0
        %464 = vmatpush1.bf16.msra.mxu0 0
        %465 = vmatprep.subr.bf16.mxu0 0
        %466 = vmatpush1.bf16.msra.mxu0 0
        %467 = vmatprep.subr.bf16.mxu0 0
        %468 = vmatpush1.bf16.msra.mxu0 0
        %469 = vmatprep.subr.bf16.mxu0 0
        %470 = vmatpush1.bf16.msra.mxu0 0
        %471 = vmatprep.subr.bf16.mxu0 0
        %472 = vmatpush1.bf16.msra.mxu0 0
        %473 = vmatprep.subr.bf16.mxu0 0
        %474 = vmatpush1.bf16.msra.mxu0 0
        %475 = vmatprep.subr.bf16.mxu0 0
        %476 = vmatpush1.bf16.msra.mxu0 0
        %477 = vmatprep.subr.bf16.mxu0 0
        %478 = vmatpush1.bf16.msra.mxu0 0
        %479 = vmatprep.subr.bf16.mxu0 0
        %480 = vmatpush1.bf16.msra.mxu0 0
        %481 = vmatprep.subr.bf16.mxu0 0
        %482 = vmatpush1.bf16.msra.mxu0 0
        %483 = vmatprep.subr.bf16.mxu0 0
        %484 = vmatpush1.bf16.msra.mxu0 0
        %485 = vmatprep.subr.bf16.mxu0 0
        %486 = vmatpush1.bf16.msra.mxu0 0
        %487 = vmatprep.subr.bf16.mxu0 0
        %488 = vmatpush1.bf16.msra.mxu0 0
        %489 = vmatprep.subr.bf16.mxu0 0
        %490 = vmatpush1.bf16.msra.mxu0 0
        %491 = vmatprep.subr.bf16.mxu0 0
        %492 = vmatpush1.bf16.msra.mxu0 0
        %493 = vmatprep.mubr.bf16.mxu0 0
        %494 = vmatmul.mubr.bf16.gmra.mrb[0].mxu0 %v456
        %v495 = vpop.f32.mrb[0].mxu0
        %v496 = vadd.f32 %v424, %v495
        %v497 = vpop.f32.mrb[0].mxu0
        %v498 = vpop.f32.mrb[0].mxu0
        %v499 = vadd.f32 %v427, %v498
        %v500 = vpop.f32.mrb[0].mxu0
        %501 = vmatprep.mubr.bf16.mxu0 0
        %502 = vmatmul.mubr.bf16.gmra.mrb[0].mxu0 %v459
        %v503 = vpop.f32.mrb[0].mxu0
        %v504 = vadd.f32 %v432, %v503
        %v505 = vpop.f32.mrb[0].mxu0
        %v506 = vpop.f32.mrb[0].mxu0
        %v507 = vadd.f32 %v435, %v506
        %v508 = vpop.f32.mrb[0].mxu0
        %509 = vdwg.mxu0
        %v510 = vld [vmem:[%s4] sm:$0x1]
        %v512 = vlaneseq
        %v513 = vshrl.u32 %v512, 7
        %v514 = vsub.s32 0, %v513
        %v515 = vrot.slane %v510, %v514
        %v517 = vadd.f32 %v496, %v515
        %v518 = vadd.f32 %v499, %v515
        %v519 = vadd.f32 %v504, %v515
        %v520 = vadd.f32 %v507, %v515
        %v521 = vmax.f32 %v517, 0.0
        %v522 = vmax.f32 %v518, 0.0
        %v523 = vmax.f32 %v519, 0.0
        %v524 = vmax.f32 %v520, 0.0
        %v525 = vpack.c.bf16 %v522, %v521
        %v526 = vpack.c.bf16 %v524, %v523
        %v527 = vld [vmem:[%s5] sm:$0xf]
        %v528 = vld [vmem:[%s5 + $0x4] sm:$0xf]
        %v529 = vld [vmem:[%s5 + $0x8] sm:$0xf]
        %v530 = vld [vmem:[%s5 + $0xc] sm:$0xf]
        %v531 = vld [vmem:[%s6] sm:$0x1]
        %v533 = vlaneseq
        %v534 = vshrl.u32 %v533, 7
        %v535 = vsub.s32 0, %v534
        %v536 = vrot.slane %v531, %v535
        %v542 = vunpack.c.l.b16 %v527
        %v543 = vunpack.c.l.b16 %v528
        %v544 = vunpack.c.l.b16 %v529
        %v545 = vunpack.c.l.b16 %v530
        %v546 = vpack.c.b16 %v543, %v542
        %v547 = vpack.c.b16 %v545, %v544
        %vm550 = vcmask 261120
        %v552 = vsel %vm550, %v525, 0
        %v555 = vsel %vm550, %v526, 0
        %557 = vmatprep.subr.bf16.mxu0 0
        %558 = vmatpush1.bf16.msra.mxu0 %v546
        %559 = vmatprep.subr.bf16.mxu0 0
        %560 = vmatpush1.bf16.msra.mxu0 %v547
        %561 = vmatprep.subr.bf16.mxu0 0
        %562 = vmatpush1.bf16.msra.mxu0 0
        %563 = vmatprep.subr.bf16.mxu0 0
        %564 = vmatpush1.bf16.msra.mxu0 0
        %565 = vmatprep.subr.bf16.mxu0 0
        %566 = vmatpush1.bf16.msra.mxu0 0
        %567 = vmatprep.subr.bf16.mxu0 0
        %568 = vmatpush1.bf16.msra.mxu0 0
        %569 = vmatprep.subr.bf16.mxu0 0
        %570 = vmatpush1.bf16.msra.mxu0 0
        %571 = vmatprep.subr.bf16.mxu0 0
        %572 = vmatpush1.bf16.msra.mxu0 0
        %573 = vmatprep.subr.bf16.mxu0 0
        %574 = vmatpush1.bf16.msra.mxu0 0
        %575 = vmatprep.subr.bf16.mxu0 0
        %576 = vmatpush1.bf16.msra.mxu0 0
        %577 = vmatprep.subr.bf16.mxu0 0
        %578 = vmatpush1.bf16.msra.mxu0 0
        %579 = vmatprep.subr.bf16.mxu0 0
        %580 = vmatpush1.bf16.msra.mxu0 0
        %581 = vmatprep.subr.bf16.mxu0 0
        %582 = vmatpush1.bf16.msra.mxu0 0
        %583 = vmatprep.subr.bf16.mxu0 0
        %584 = vmatpush1.bf16.msra.mxu0 0
        %585 = vmatprep.subr.bf16.mxu0 0
        %586 = vmatpush1.bf16.msra.mxu0 0
        %587 = vmatprep.subr.bf16.mxu0 0
        %588 = vmatpush1.bf16.msra.mxu0 0
        %589 = vmatprep.mubr.bf16.mxu0 0
        %590 = vmatmul.mubr.bf16.gmra.mrb[0].mxu0 %v552
        %v591 = vpop.f32.mrb[0].mxu0
        %v592 = vadd.f32 %v536, %v591
        %v593 = vpop.f32.mrb[0].mxu0
        %v594 = vpop.f32.mrb[0].mxu0
        %v595 = vadd.f32 %v536, %v594
        %v596 = vpop.f32.mrb[0].mxu0
        %597 = vmatprep.mubr.bf16.mxu0 0
        %598 = vmatmul.mubr.bf16.gmra.mrb[0].mxu0 %v555
        %v599 = vpop.f32.mrb[0].mxu0
        %v600 = vadd.f32 %v536, %v599
        %v601 = vpop.f32.mrb[0].mxu0
        %v602 = vpop.f32.mrb[0].mxu0
        %v603 = vadd.f32 %v536, %v602
        %v604 = vpop.f32.mrb[0].mxu0
        %605 = vdwg.mxu0
        %v606 = vmax.f32 %v592, 0.0
        %v607 = vmax.f32 %v595, 0.0
        %v608 = vmax.f32 %v600, 0.0
        %v609 = vmax.f32 %v603, 0.0
        %v610 = vld [vmem:[%s7] sm:$0xf]
        %v611 = vpack.c.bf16 %v607, %v606
        %v612 = vpack.c.bf16 %v609, %v608
        %v614 = vsel %vm550, %v610, 0
        %v617 = vsel %vm550, %v611, 0
        %v620 = vsel %vm550, %v612, 0
        %622 = vmatprep.subr.bf16.mxu0 0
        %623 = vmatpush1.bf16.xpose.msra.mxu0 %v617
        %624 = vmatprep.subr.bf16.mxu0 0
        %625 = vmatpush1.bf16.xpose.msra.mxu0 %v620
        %626 = vmatprep.subr.bf16.mxu0 0
        %627 = vmatpush1.bf16.xpose.msra.mxu0 0
        %628 = vmatprep.subr.bf16.mxu0 0
        %629 = vmatpush1.bf16.xpose.msra.mxu0 0
        %630 = vmatprep.subr.bf16.mxu0 0
        %631 = vmatpush1.bf16.xpose.msra.mxu0 0
        %632 = vmatprep.subr.bf16.mxu0 0
        %633 = vmatpush1.bf16.xpose.msra.mxu0 0
        %634 = vmatprep.subr.bf16.mxu0 0
        %635 = vmatpush1.bf16.xpose.msra.mxu0 0
        %636 = vmatprep.subr.bf16.mxu0 0
        %637 = vmatpush1.bf16.xpose.msra.mxu0 0
        %638 = vmatprep.subr.bf16.mxu0 0
        %639 = vmatpush1.bf16.xpose.msra.mxu0 0
        %640 = vmatprep.subr.bf16.mxu0 0
        %641 = vmatpush1.bf16.xpose.msra.mxu0 0
        %642 = vmatprep.subr.bf16.mxu0 0
        %643 = vmatpush1.bf16.xpose.msra.mxu0 0
        %644 = vmatprep.subr.bf16.mxu0 0
        %645 = vmatpush1.bf16.xpose.msra.mxu0 0
        %646 = vmatprep.subr.bf16.mxu0 0
        %647 = vmatpush1.bf16.xpose.msra.mxu0 0
        %648 = vmatprep.subr.bf16.mxu0 0
        %649 = vmatpush1.bf16.xpose.msra.mxu0 0
        %650 = vmatprep.subr.bf16.mxu0 0
        %651 = vmatpush1.bf16.xpose.msra.mxu0 0
        %652 = vmatprep.subr.bf16.mxu0 0
        %653 = vmatpush1.bf16.xpose.msra.mxu0 0
        %654 = vmatprep.mubr.bf16.mxu0 0
        %655 = vmatmul.mubr.bf16.gmra.mrb[0].mxu0 %v614
        %v656 = vpop.f32.mrb[0].mxu0
        %v657 = vadd.f32 0.0, %v656
        %v658 = vpop.f32.mrb[0].mxu0
        %v659 = vpop.f32.mrb[0].mxu0
        %v660 = vpop.f32.mrb[0].mxu0
        %661 = vdwg.mxu0
        %v662 = vld [vmem:[#allocation2] sm:$0x1]
        %664 = vset.pattern.permute.xlu0 0
        %665 = vperm.xlu0 %664, %v662
        %v666 = vpop.permute.xlu0 %665
        %v668 = vlaneseq
        %v669 = vshrl.u32 %v668, 7
        %v670 = vsub.s32 0, %v669
        %v671 = vrot.slane %v666, %v670
        %v672 = vadd.f32 %v657, %v671
        %vm673 = vcmask 253952
        %674 = vst.msk [vmem:[%s343] sm:$0x1] %vm673, %v672
        %s675 = sand.u32 %s232, 1
        %s676 = scalar_lea.sflag [#allocation4], %s675
        %s677 = sand.u32 %s232, 1
        %s678 = scalar_lea.vmem [#allocation3], %s677
        // Predicated region
        $region57: #{tpu_custom_call.1} parent=55 // pred_check
          %p679 = pneg %p242
        $region58: #{tpu_custom_call.1} parent=55 // pred_check_branch
          %681 = sbr.rel (%p679) target = $region60
        $region59: #{tpu_custom_call.1} parent=55 // pred_region
          %s683 = ssub.s32 16, 16
          %684 = vsyncadd %s676, %s683
          %s685 = smul.addr %s25, 16
          %s686 = scalar_lea.hbm %s9, %s685
          %s688 = sshll.u32 %s678, 4
          %s689 = int_to_ptr.vmem [resolvable:$true] %s688
          %691 = dma.vmem_to_hbm [thread:$0]  %s689, 16, %s686, %s676
        $region60: #{tpu_custom_call.1} parent=55 // pred_fallthru
          _
      $region56: #{tpu_custom_call.1} parent=5 // pred_fallthru
        _
      %p692 = scmp.le.s32.totalorder 2, %s20
      // Predicated region
      $region61: #{tpu_custom_call.1} parent=5 // pred_check
        %p693 = pneg %p692
      $region62: #{tpu_custom_call.1} parent=5 // pred_check_branch
        %695 = sbr.rel (%p693) target = $region64
      $region63: #{tpu_custom_call.1} parent=5 // pred_region
        %s696 = ssub.s32 %s20, 2
        // Predicated region
        $region65: #{tpu_custom_call.1} parent=63 // pred_check
          %p697 = pneg %p248
        $region66: #{tpu_custom_call.1} parent=63 // pred_check_branch
          %699 = sbr.rel (%p697) target = $region68
        $region67: #{tpu_custom_call.1} parent=63 // pred_region
          %s700 = sand.u32 %s233, 1
          %s701 = scalar_lea.sflag [#allocation4], %s700
          %s702 = sand.u32 %s233, 1
          %s703 = scalar_lea.vmem [#allocation3], %s702
          %704 = dma.done %s701, 16
        $region68: #{tpu_custom_call.1} parent=63 // pred_fallthru
          _
      $region64: #{tpu_custom_call.1} parent=5 // pred_fallthru
        _
    $region6: #{tpu_custom_call.1} parent=1 // loop_footer
      %s24 = sadd.s32 1, %s20
    $region7: #{tpu_custom_call.1} parent=1 // loop_footer_branch
      %19 = sbr.rel target = $region3
    $region8: #{tpu_custom_call.1} parent=1 // loop_exit
      _
    %705 = vsyncpa [#allocation4], 1
    %s706 = scalar_lea.sflag [#allocation4], 1
    %707 = vsyncpa %s706, 1

</llo_original>
